<compile_context>
chip_gen: v7x
topology: tpu7x:2x2x1
jax: 0.10.0
libtpu: 0.0.40
codegen_flags: <defaults>
</compile_context>

<pallas_src>
import jax
import jax.numpy as jnp
from jax.experimental import pallas as pl
from jax.experimental.pallas import tpu as pltpu


def rlnet_kernel(x_ref, w1_ref, b1_ref, w2_ref, b2_ref, out_ref):
    # x_ref  : (TILE_B, obs)  f32   -- natural layout, no wrapper transpose
    # w1_ref : (obs, 128)     bf16  -- VMEM-resident across all batch tiles
    # b1_ref : (1, 128)       f32
    # w2_ref : (128, act)     bf16
    # b2_ref : (1, act)       f32
    # out_ref: (TILE_B, act)  f32   -- natural layout, contiguous HBM writeback
    x = x_ref[...].astype(w1_ref.dtype)                       # bf16 cast on VPU
    h = jnp.dot(x, w1_ref[...], preferred_element_type=jnp.float32)  # (TILE_B,128)
    h = jnp.maximum(h + b1_ref[...], 0.0)                     # bias + ReLU in f32
    o = jnp.dot(h.astype(w2_ref.dtype), w2_ref[...],
                preferred_element_type=jnp.float32)           # (TILE_B, act)
    out_ref[...] = (o + b2_ref[...]).astype(out_ref.dtype)


def _round_up(n, m):
    return ((n + m - 1) // m) * m


def rlnet_forward(x, w1, b1, w2, b2, *, tile_b=8192, compute_dtype=jnp.bfloat16):
    """x: (B, obs) f32; w1: (obs,128); b1: (1,128); w2: (128,act); b2: (1,act).

    Returns (B, act) f32, matching relu(x @ w1 + b1) @ w2 + b2
    (bf16 MXU operands, f32 accumulation).
    """
    batch, obs = x.shape
    hidden = w1.shape[1]
    act = w2.shape[1]

    # ---- batch-tile selection -------------------------------------------------
    if batch <= 256:
        # Single tile; block == full array dim is always legal.
        tile = batch
    else:
        # Multiple of 128, capped so the grid has >= 2 steps (v7x megacore) and
        # by tile_b (VMEM budget: x f32 + h f32 + h bf16 + out, double-buffered).
        half = _round_up(pl.cdiv(batch, 2), 128)
        tile = max(128, min((tile_b // 128) * 128, half))
    padded_b = _round_up(batch, tile)
    n_tiles = padded_b // tile

    x_in = x
    if padded_b != batch:
        # Ragged batch: zero-pad rows (one extra x copy); padded rows compute
        # relu(b1) @ w2 + b2 garbage and are sliced off below.
        x_in = jnp.pad(x, ((0, padded_b - batch), (0, 0)))

    # Weights/biases: tiny, one-time cast/reshape in the wrapper is fine.
    w1_c = w1.astype(compute_dtype)                      # (obs, 128)
    w2_c = w2.astype(compute_dtype)                      # (128, act)
    b1_c = jnp.reshape(b1, (1, hidden)).astype(jnp.float32)
    b2_c = jnp.reshape(b2, (1, act)).astype(jnp.float32)

    flops = 2 * padded_b * (obs * hidden + hidden * act)
    bytes_accessed = (
        padded_b * obs * 4                 # x read (f32, natural layout)
        + obs * hidden * 2 + hidden * act * 2   # bf16 weights
        + (hidden + act) * 4               # biases
        + padded_b * act * 4               # out write (f32)
    )

    out = pl.pallas_call(
        rlnet_kernel,
        out_shape=jax.ShapeDtypeStruct((padded_b, act), jnp.float32),
        grid_spec=pltpu.PrefetchScalarGridSpec(
            num_scalar_prefetch=0,
            grid=(n_tiles,),
            in_specs=[
                pl.BlockSpec((tile, obs), lambda i: (i, 0)),     # x tile (streamed)
                pl.BlockSpec((obs, hidden), lambda i: (0, 0)),   # W1 resident
                pl.BlockSpec((1, hidden), lambda i: (0, 0)),     # b1 resident
                pl.BlockSpec((hidden, act), lambda i: (0, 0)),   # W2 resident
                pl.BlockSpec((1, act), lambda i: (0, 0)),        # b2 resident
            ],
            out_specs=pl.BlockSpec((tile, act), lambda i: (i, 0)),
        ),
        compiler_params=pltpu.CompilerParams(
            dimension_semantics=("parallel",),
            vmem_limit_bytes=48 * 1024 * 1024,
        ),
        cost_estimate=pl.CostEstimate(
            flops=int(flops), transcendentals=0, bytes_accessed=int(bytes_accessed)),
    )(x_in, w1_c, b1_c, w2_c, b2_c)

    return out if padded_b == batch else out[:batch]


def rlnet_reference(x, w1, b1, w2, b2, compute_dtype=jnp.bfloat16):
    # Pure-JAX reference with the same bf16-operand / f32-accumulation recipe.
    h = jnp.dot(x.astype(compute_dtype), w1.astype(compute_dtype),
                preferred_element_type=jnp.float32) + b1.reshape(1, -1)
    h = jnp.maximum(h, 0.0)
    return jnp.dot(h.astype(compute_dtype), w2.astype(compute_dtype),
                   preferred_element_type=jnp.float32) + b2.reshape(1, -1)


def init_params(key, obs_size, act_size, hidden=128):
    # Deterministic init mimicking nn.Linear's U(-1/sqrt(fan_in), 1/sqrt(fan_in)).
    k1, k2, k3, k4 = jax.random.split(key, 4)
    lim1 = 1.0 / (obs_size ** 0.5)
    lim2 = 1.0 / (hidden ** 0.5)
    w1 = jax.random.uniform(k1, (obs_size, hidden), jnp.float32, -lim1, lim1)
    b1 = jax.random.uniform(k2, (1, hidden), jnp.float32, -lim1, lim1)
    w2 = jax.random.uniform(k3, (hidden, act_size), jnp.float32, -lim2, lim2)
    b2 = jax.random.uniform(k4, (1, act_size), jnp.float32, -lim2, lim2)
    return w1, b1, w2, b2


if __name__ == "__main__":
    obs_size, act_size = 32, 4

    key = jax.random.PRNGKey(0)
    kx, kp, kx2 = jax.random.split(key, 3)
    w1, b1, w2, b2 = init_params(kp, obs_size, act_size)

    # Small single-tile case (grid=(1,), block == full array dims).
    batch = 8
    x = jax.random.normal(kx, (batch, obs_size), jnp.float32)
    out = rlnet_forward(x, w1, b1, w2, b2)
    jax.block_until_ready(out)
    ref = rlnet_reference(x, w1, b1, w2, b2)
    assert out.shape == (batch, act_size)
    assert jnp.allclose(out, ref, atol=2e-3, rtol=2e-3)

    # Multi-tile + ragged-batch case: batch=300 -> tile=256, grid=(2,), padded
    # to 512 (exercises >=2 grid steps for v7x megacore and the padding path).
    batch2 = 300
    x2 = jax.random.normal(kx2, (batch2, obs_size), jnp.float32)
    out2 = rlnet_forward(x2, w1, b1, w2, b2)
    jax.block_until_ready(out2)
    ref2 = rlnet_reference(x2, w1, b1, w2, b2)
    assert out2.shape == (batch2, act_size)
    assert jnp.allclose(out2, ref2, atol=2e-3, rtol=2e-3)

    print("KERNEL_OK")
</pallas_src>

<mosaic_0001>
module attributes {stable_mosaic.version = 11 : i64} {
  func.func @rlnet_kernel(%arg0: i32, %arg1: memref<8x32xf32, #tpu.memory_space<vmem>>, %arg2: memref<32x128xbf16, #tpu.memory_space<vmem>>, %arg3: memref<1x128xf32, #tpu.memory_space<vmem>>, %arg4: memref<128x4xbf16, #tpu.memory_space<vmem>>, %arg5: memref<1x4xf32, #tpu.memory_space<vmem>>, %arg6: memref<8x4xf32, #tpu.memory_space<vmem>>) attributes {dimension_semantics = [#tpu.dimension_semantics<parallel>], iteration_bounds = array<i64: 1>, scalar_prefetch = 0 : i64, scratch_operands = 0 : i64, tpu.core_type = #tpu.core_type<tc>, window_params = [{transform_indices = @transform_0, window_bounds = array<i64: 8, 32>}, {pipeline_mode = #tpu.pipeline_mode<synchronous>, transform_indices = @transform_1, window_bounds = array<i64: 32, 128>}, {pipeline_mode = #tpu.pipeline_mode<synchronous>, transform_indices = @transform_2, window_bounds = array<i64: 1, 128>}, {pipeline_mode = #tpu.pipeline_mode<synchronous>, transform_indices = @transform_3, window_bounds = array<i64: 128, 4>}, {pipeline_mode = #tpu.pipeline_mode<synchronous>, transform_indices = @transform_4, window_bounds = array<i64: 1, 4>}, {transform_indices = @transform_5, window_bounds = array<i64: 8, 4>}]} {
    %c0 = arith.constant 0 : index
    %c0_0 = arith.constant 0 : index
    %0 = vector.load %arg1[%c0, %c0_0] : memref<8x32xf32, #tpu.memory_space<vmem>>, vector<8x32xf32>
    %1 = arith.truncf %0 : vector<8x32xf32> to vector<8x32xbf16>
    %c0_1 = arith.constant 0 : index
    %c0_2 = arith.constant 0 : index
    %2 = vector.load %arg2[%c0_1, %c0_2] : memref<32x128xbf16, #tpu.memory_space<vmem>>, vector<32x128xbf16>
    %cst = arith.constant dense<0.000000e+00> : vector<8x128xf32>
    %3 = tpu.matmul %1, %2, %cst {dimension_numbers = #tpu.dot_dimension_numbers<[1], [0], [0], [1], [0, 0, 1, 1], [], []>} : vector<8x32xbf16>, vector<32x128xbf16>, vector<8x128xf32> -> vector<8x128xf32>
    %c0_3 = arith.constant 0 : index
    %c0_4 = arith.constant 0 : index
    %4 = vector.load %arg3[%c0_3, %c0_4] : memref<1x128xf32, #tpu.memory_space<vmem>>, vector<1x128xf32>
    %5 = vector.broadcast %4 : vector<1x128xf32> to vector<8x128xf32>
    %6 = arith.addf %3, %5 : vector<8x128xf32>
    %cst_5 = arith.constant 0.000000e+00 : f32
    %7 = vector.broadcast %cst_5 : f32 to vector<8x128xf32>
    %8 = arith.maximumf %6, %7 : vector<8x128xf32>
    %9 = arith.truncf %8 : vector<8x128xf32> to vector<8x128xbf16>
    %c0_6 = arith.constant 0 : index
    %c0_7 = arith.constant 0 : index
    %10 = vector.load %arg4[%c0_6, %c0_7] : memref<128x4xbf16, #tpu.memory_space<vmem>>, vector<128x4xbf16>
    %cst_8 = arith.constant dense<0.000000e+00> : vector<8x4xf32>
    %11 = tpu.matmul %9, %10, %cst_8 {dimension_numbers = #tpu.dot_dimension_numbers<[1], [0], [0], [1], [0, 0, 1, 1], [], []>} : vector<8x128xbf16>, vector<128x4xbf16>, vector<8x4xf32> -> vector<8x4xf32>
    %c0_9 = arith.constant 0 : index
    %c0_10 = arith.constant 0 : index
    %12 = vector.load %arg5[%c0_9, %c0_10] : memref<1x4xf32, #tpu.memory_space<vmem>>, vector<1x4xf32>
    %13 = vector.broadcast %12 : vector<1x4xf32> to vector<8x4xf32>
    %14 = arith.addf %11, %13 : vector<8x4xf32>
    %c0_11 = arith.constant 0 : index
    %c0_12 = arith.constant 0 : index
    %15 = vector.load %arg6[%c0_11, %c0_12] : memref<8x4xf32, #tpu.memory_space<vmem>>, vector<8x4xf32>
    tpu.vector_store %arg6[%c0_11, %c0_12], %14 {strides = array<i32>} : memref<8x4xf32, #tpu.memory_space<vmem>>, vector<8x4xf32>,
    return
  }
  func.func @transform_0(%arg0: i32) -> (i32, i32) {
    %c0_i32 = arith.constant 0 : i32
    %c0_i32_0 = arith.constant 0 : i32
    return %arg0, %c0_i32 : i32, i32
  }
  func.func @transform_1(%arg0: i32) -> (i32, i32) {
    %c0_i32 = arith.constant 0 : i32
    %c0_i32_0 = arith.constant 0 : i32
    %c0_i32_1 = arith.constant 0 : i32
    return %c0_i32, %c0_i32_0 : i32, i32
  }
  func.func @transform_2(%arg0: i32) -> (i32, i32) {
    %c0_i32 = arith.constant 0 : i32
    %c0_i32_0 = arith.constant 0 : i32
    %c0_i32_1 = arith.constant 0 : i32
    return %c0_i32, %c0_i32_0 : i32, i32
  }
  func.func @transform_3(%arg0: i32) -> (i32, i32) {
    %c0_i32 = arith.constant 0 : i32
    %c0_i32_0 = arith.constant 0 : i32
    %c0_i32_1 = arith.constant 0 : i32
    return %c0_i32, %c0_i32_0 : i32, i32
  }
  func.func @transform_4(%arg0: i32) -> (i32, i32) {
    %c0_i32 = arith.constant 0 : i32
    %c0_i32_0 = arith.constant 0 : i32
    %c0_i32_1 = arith.constant 0 : i32
    return %c0_i32, %c0_i32_0 : i32, i32
  }
  func.func @transform_5(%arg0: i32) -> (i32, i32) {
    %c0_i32 = arith.constant 0 : i32
    %c0_i32_0 = arith.constant 0 : i32
    return %arg0, %c0_i32 : i32, i32
  }
}

</mosaic_0001>

<llo_original>
// kernel: tpu_custom_call.1
$region0: #{tpu_custom_call.1}
  #allocation0 [shape = 'u32[]', space=smem, size = 0x4, offset = 0x4, fixed_abs, tag = 'smem constant byte address 0x4 - core index']
  #allocation1 [shape = 'u32[144,128]{1,0:T(1,128)}', space=vmem, size = 0x12000, scoped, tag = 'internal scratch']
  %s0 = inlined_call_operand.vmem [shape: f32[8,32], index: 0, kind: input, shape index: {}]
  %s1 = inlined_call_operand.vmem [shape: bf16[32,128], index: 1, kind: input, shape index: {}]
  %s2 = inlined_call_operand.vmem [shape: f32[1,128], index: 2, kind: input, shape index: {}]
  %s3 = inlined_call_operand.vmem [shape: bf16[128,4], index: 3, kind: input, shape index: {}]
  %s4 = inlined_call_operand.vmem [shape: f32[1,4], index: 4, kind: input, shape index: {}]
  %s5 = inlined_call_operand.vmem [shape: f32[8,4], index: 5, kind: output, shape index: {}]
  %s6 = sld [smem:[#allocation0]]
  $region30: #{tpu_custom_call.1} parent=0
    _
  %s8 = ssub.s32 1, %s6
  %s9 = scalar_select 0, %s8, %s6
  // Predicated region
  $region2: #{tpu_custom_call.1} parent=0 // pred_check
    _
  $region3: #{tpu_custom_call.1} parent=0 // pred_check_branch
    %11 = sbr.rel (0) target = $region5
  $region4: #{tpu_custom_call.1} parent=0 // pred_region
    _
  $region5: #{tpu_custom_call.1} parent=0 // pred_fallthru
    _
  // Predicated region
  $region6: #{tpu_custom_call.1} parent=0 // pred_check
    _
  $region7: #{tpu_custom_call.1} parent=0 // pred_check_branch
    %13 = sbr.rel (0) target = $region9
  $region8: #{tpu_custom_call.1} parent=0 // pred_region
    _
  $region9: #{tpu_custom_call.1} parent=0 // pred_fallthru
    _
  // Predicated region
  $region10: #{tpu_custom_call.1} parent=0 // pred_check
    _
  $region11: #{tpu_custom_call.1} parent=0 // pred_check_branch
    %15 = sbr.rel (0) target = $region13
  $region12: #{tpu_custom_call.1} parent=0 // pred_region
    _
  $region13: #{tpu_custom_call.1} parent=0 // pred_fallthru
    _
  // Predicated region
  $region14: #{tpu_custom_call.1} parent=0 // pred_check
    _
  $region15: #{tpu_custom_call.1} parent=0 // pred_check_branch
    %17 = sbr.rel (0) target = $region17
  $region16: #{tpu_custom_call.1} parent=0 // pred_region
    _
  $region17: #{tpu_custom_call.1} parent=0 // pred_fallthru
    _
  // Predicated region
  $region18: #{tpu_custom_call.1} parent=0 // pred_check
    _
  $region19: #{tpu_custom_call.1} parent=0 // pred_check_branch
    %19 = sbr.rel (0) target = $region21
  $region20: #{tpu_custom_call.1} parent=0 // pred_region
    _
  $region21: #{tpu_custom_call.1} parent=0 // pred_fallthru
    _
  %v21 = vld [vmem:[%s0] sm:$0xff]
  %v22 = vpack.c.bf16 %v21, %v21
  %v23 = vld [vmem:[%s1] sm:$0xf]
  %v24 = vld [vmem:[%s1 + $0x4] sm:$0xf]
  %v25 = vld [vmem:[%s1 + $0x8] sm:$0xf]
  %v26 = vld [vmem:[%s1 + $0xc] sm:$0xf]
  %v27 = vld [vmem:[%s2] sm:$0x1]
  %v29 = vlaneseq
  %v30 = vshrl.u32 %v29, 7
  %v31 = vsub.s32 0, %v30
  %v32 = vrot.slane %v27, %v31
  %v38 = vunpack.c.l.b16 %v23
  %v39 = vunpack.c.l.b16 %v24
  %v40 = vunpack.c.l.b16 %v25
  %v41 = vunpack.c.l.b16 %v26
  %v42 = vpack.c.b16 %v39, %v38
  %v43 = vpack.c.b16 %v41, %v40
  %vm46 = vcmask 261120
  %v48 = vsel %vm46, %v22, 0
  %50 = vmatprep.subr.bf16.mxu0 0
  %51 = vmatpush1.bf16.msra.mxu0 %v42
  %52 = vmatprep.subr.bf16.mxu0 0
  %53 = vmatpush1.bf16.msra.mxu0 %v43
  %54 = vmatprep.subr.bf16.mxu0 0
  %55 = vmatpush1.bf16.msra.mxu0 0
  %56 = vmatprep.subr.bf16.mxu0 0
  %57 = vmatpush1.bf16.msra.mxu0 0
  %58 = vmatprep.subr.bf16.mxu0 0
  %59 = vmatpush1.bf16.msra.mxu0 0
  %60 = vmatprep.subr.bf16.mxu0 0
  %61 = vmatpush1.bf16.msra.mxu0 0
  %62 = vmatprep.subr.bf16.mxu0 0
  %63 = vmatpush1.bf16.msra.mxu0 0
  %64 = vmatprep.subr.bf16.mxu0 0
  %65 = vmatpush1.bf16.msra.mxu0 0
  %66 = vmatprep.subr.bf16.mxu0 0
  %67 = vmatpush1.bf16.msra.mxu0 0
  %68 = vmatprep.subr.bf16.mxu0 0
  %69 = vmatpush1.bf16.msra.mxu0 0
  %70 = vmatprep.subr.bf16.mxu0 0
  %71 = vmatpush1.bf16.msra.mxu0 0
  %72 = vmatprep.subr.bf16.mxu0 0
  %73 = vmatpush1.bf16.msra.mxu0 0
  %74 = vmatprep.subr.bf16.mxu0 0
  %75 = vmatpush1.bf16.msra.mxu0 0
  %76 = vmatprep.subr.bf16.mxu0 0
  %77 = vmatpush1.bf16.msra.mxu0 0
  %78 = vmatprep.subr.bf16.mxu0 0
  %79 = vmatpush1.bf16.msra.mxu0 0
  %80 = vmatprep.subr.bf16.mxu0 0
  %81 = vmatpush1.bf16.msra.mxu0 0
  %82 = vmatprep.mubr.bf16.mxu0 0
  %83 = vmatmul.mubr.bf16.gmra.mrb[0].mxu0 %v48
  %v84 = vpop.f32.mrb[0].mxu0
  %v85 = vadd.f32 %v32, %v84
  %v86 = vpop.f32.mrb[0].mxu0
  %v87 = vpop.f32.mrb[0].mxu0
  %v88 = vpop.f32.mrb[0].mxu0
  %89 = vdwg.mxu0
  %v90 = vmax.f32 %v85, 0.0
  %v91 = vpack.c.bf16 %v90, %v90
  %v92 = vld [vmem:[%s3] sm:$0xf]
  %v93 = vld [vmem:[%s3 + $0x4] sm:$0xf]
  %v94 = vld [vmem:[%s3 + $0x8] sm:$0xf]
  %v95 = vld [vmem:[%s3 + $0xc] sm:$0xf]
  %v96 = vld [vmem:[%s3 + $0x10] sm:$0xf]
  %v97 = vld [vmem:[%s3 + $0x14] sm:$0xf]
  %v98 = vld [vmem:[%s3 + $0x18] sm:$0xf]
  %v99 = vld [vmem:[%s3 + $0x1c] sm:$0xf]
  %v100 = vld [vmem:[%s3 + $0x20] sm:$0xf]
  %v101 = vld [vmem:[%s3 + $0x24] sm:$0xf]
  %v102 = vld [vmem:[%s3 + $0x28] sm:$0xf]
  %v103 = vld [vmem:[%s3 + $0x2c] sm:$0xf]
  %v104 = vld [vmem:[%s3 + $0x30] sm:$0xf]
  %v105 = vld [vmem:[%s3 + $0x34] sm:$0xf]
  %v106 = vld [vmem:[%s3 + $0x38] sm:$0xf]
  %v107 = vld [vmem:[%s3 + $0x3c] sm:$0xf]
  %v108 = vld [vmem:[%s4] sm:$0x1]
  %v110 = vlaneseq
  %v111 = vshrl.u32 %v110, 7
  %v112 = vsub.s32 0, %v111
  %v113 = vrot.slane %v108, %v112
  %v131 = vunpack.c.l.b16 %v92
  %v132 = vunpack.c.l.b16 %v93
  %v133 = vunpack.c.l.b16 %v94
  %v134 = vunpack.c.l.b16 %v95
  %v135 = vunpack.c.l.b16 %v96
  %v136 = vunpack.c.l.b16 %v97
  %v137 = vunpack.c.l.b16 %v98
  %v138 = vunpack.c.l.b16 %v99
  %v139 = vunpack.c.l.b16 %v100
  %v140 = vunpack.c.l.b16 %v101
  %v141 = vunpack.c.l.b16 %v102
  %v142 = vunpack.c.l.b16 %v103
  %v143 = vunpack.c.l.b16 %v104
  %v144 = vunpack.c.l.b16 %v105
  %v145 = vunpack.c.l.b16 %v106
  %v146 = vunpack.c.l.b16 %v107
  %v147 = vpack.c.b16 %v132, %v131
  %v148 = vpack.c.b16 %v134, %v133
  %v149 = vpack.c.b16 %v136, %v135
  %v150 = vpack.c.b16 %v138, %v137
  %v151 = vpack.c.b16 %v140, %v139
  %v152 = vpack.c.b16 %v142, %v141
  %v153 = vpack.c.b16 %v144, %v143
  %v154 = vpack.c.b16 %v146, %v145
  %163 = vmatprep.subr.bf16.mxu0 0
  %164 = vmatpush1.bf16.msra.mxu0 %v147
  %165 = vmatprep.subr.bf16.mxu0 0
  %166 = vmatpush1.bf16.msra.mxu0 %v148
  %167 = vmatprep.subr.bf16.mxu0 0
  %168 = vmatpush1.bf16.msra.mxu0 %v149
  %169 = vmatprep.subr.bf16.mxu0 0
  %170 = vmatpush1.bf16.msra.mxu0 %v150
  %171 = vmatprep.subr.bf16.mxu0 0
  %172 = vmatpush1.bf16.msra.mxu0 %v151
  %173 = vmatprep.subr.bf16.mxu0 0
  %174 = vmatpush1.bf16.msra.mxu0 %v152
  %175 = vmatprep.subr.bf16.mxu0 0
  %176 = vmatpush1.bf16.msra.mxu0 %v153
  %177 = vmatprep.subr.bf16.mxu0 0
  %178 = vmatpush1.bf16.msra.mxu0 %v154
  %179 = vmatprep.subr.bf16.mxu0 0
  %180 = vmatpush1.bf16.msra.mxu0 0
  %181 = vmatprep.subr.bf16.mxu0 0
  %182 = vmatpush1.bf16.msra.mxu0 0
  %183 = vmatprep.subr.bf16.mxu0 0
  %184 = vmatpush1.bf16.msra.mxu0 0
  %185 = vmatprep.subr.bf16.mxu0 0
  %186 = vmatpush1.bf16.msra.mxu0 0
  %187 = vmatprep.subr.bf16.mxu0 0
  %188 = vmatpush1.bf16.msra.mxu0 0
  %189 = vmatprep.subr.bf16.mxu0 0
  %190 = vmatpush1.bf16.msra.mxu0 0
  %191 = vmatprep.subr.bf16.mxu0 0
  %192 = vmatpush1.bf16.msra.mxu0 0
  %193 = vmatprep.subr.bf16.mxu0 0
  %194 = vmatpush1.bf16.msra.mxu0 0
  %195 = vmatprep.mubr.bf16.mxu0 0
  %196 = vmatmul.mubr.bf16.gmra.mrb[0].mxu0 %v91
  %v197 = vpop.f32.mrb[0].mxu0
  %v198 = vadd.f32 %v113, %v197
  %v199 = vpop.f32.mrb[0].mxu0
  %v200 = vpop.f32.mrb[0].mxu0
  %v201 = vpop.f32.mrb[0].mxu0
  %202 = vdwg.mxu0
  %vm203 = vcmask 31744
  %204 = vst.msk [vmem:[%s5] sm:$0xff] %vm203, %v198
  // Predicated region
  $region22: #{tpu_custom_call.1} parent=0 // pred_check
    _
  $region23: #{tpu_custom_call.1} parent=0 // pred_check_branch
    %206 = sbr.rel (0) target = $region25
  $region24: #{tpu_custom_call.1} parent=0 // pred_region
    _
  $region25: #{tpu_custom_call.1} parent=0 // pred_fallthru
    _
  // Predicated region
  $region26: #{tpu_custom_call.1} parent=0 // pred_check
    _
  $region27: #{tpu_custom_call.1} parent=0 // pred_check_branch
    %208 = sbr.rel (0) target = $region29
  $region28: #{tpu_custom_call.1} parent=0 // pred_region
    _
  $region29: #{tpu_custom_call.1} parent=0 // pred_fallthru
    _

</llo_original>
